<compile_context>
chip_gen: v7x
topology: tpu7x:2x2x1
jax: 0.10.0
libtpu: 0.0.40
codegen_flags: <defaults>
</compile_context>

<pallas_src>
import functools

import jax
import jax.numpy as jnp
from jax import lax
from jax.experimental import pallas as pl
from jax.experimental.pallas import tpu as pltpu


def _div_kernel(a_ref, b_ref, out_ref, *, H, W):
    # a_ref, b_ref, out_ref: (TB, H*W) lane-dense VMEM tiles.
    a = a_ref[...]          # x[..., 0] component, flattened spatially
    b = b_ref[...]          # x[..., 1] component, flattened spatially
    tb, L = a.shape

    idx = lax.broadcasted_iota(jnp.int32, (tb, L), 1)
    # Column within a row of the flattened (H, W) image (cheap bit-and when
    # W is a power of two, which is the common case).
    if W & (W - 1) == 0:
        col = idx & (W - 1)
    else:
        col = idx % W

    zero = jnp.zeros((), dtype=a.dtype)
    # Zero the last column of `a` and the last row of `b` ONCE.  After that,
    # a plain wrapping roll reproduces the boundary behaviour of the PyTorch
    # slice-assign formulation exactly (every wrapped-in value is zero).
    am = jnp.where(col < W - 1, a, zero)          # a with last column zeroed
    bm = jnp.where(idx < (H - 1) * W, b, zero)    # b with last row zeroed

    # roll toward higher flattened index: result[p] = src[p - shift]
    out = (pltpu.roll(am, shift=1, axis=1) - am       # +a[h,w-1] - a[h,w]
           + pltpu.roll(bm, shift=W, axis=1) - bm)    # +b[h-1,w] - b[h,w]
    out_ref[...] = out


def _pick_block_batch(nc, row_bytes, target_bytes=2 * 1024 * 1024):
    """Largest TB dividing nc (multiple of 8, or nc itself) whose tile fits
    ~2 MiB per operand -> 3 operands x 2 pipeline buffers stays well under the
    v5e 16 MiB scoped-VMEM default (and trivially under v6e/v7x limits)."""
    cands = [d for d in range(1, nc + 1)
             if nc % d == 0 and (d % 8 == 0 or d == nc)]
    fitting = [d for d in cands if d * row_bytes <= target_bytes]
    if fitting:
        tb = max(fitting)
        if tb == nc:
            # Prefer a grid of length >= 2 (megacore sharding) if the
            # per-core tile is still comfortably large (>= 1 MiB).
            smaller = [d for d in fitting if d < nc and d * row_bytes >= (1 << 20)]
            if smaller:
                tb = max(smaller)
    else:
        tb = min(cands)
    return tb


@jax.jit
def div_forward(x):
    """x: (N, C, H, W, 2) -> (N, C, H, W), matching Div.forward in PyTorch."""
    N, C, H, W, two = x.shape
    assert two == 2
    NC, L = N * C, H * W

    # Split the trailing size-2 component axis on the XLA side (one fused
    # strided-copy pass) so the Pallas kernel only sees lane-dense slabs.
    # The reshapes below are contiguous and free.
    a = x[..., 0].reshape(NC, L)
    b = x[..., 1].reshape(NC, L)

    row_bytes = L * jnp.dtype(x.dtype).itemsize
    TB = _pick_block_batch(NC, row_bytes)
    grid = (NC // TB,)

    out = pl.pallas_call(
        functools.partial(_div_kernel, H=H, W=W),
        out_shape=jax.ShapeDtypeStruct((NC, L), x.dtype),
        grid=grid,
        in_specs=[pl.BlockSpec((TB, L), lambda i: (i, 0)),
                  pl.BlockSpec((TB, L), lambda i: (i, 0))],
        out_specs=pl.BlockSpec((TB, L), lambda i: (i, 0)),
        compiler_params=pltpu.CompilerParams(
            dimension_semantics=("parallel",),
            vmem_limit_bytes=64 * 1024 * 1024),
    )(a, b)

    # (NC, H*W) -> (N, C, H, W): free reshape, no transpose needed.
    return out.reshape(N, C, H, W)


def div_reference(x):
    """Pure-JAX reference replicating the PyTorch Div semantics exactly."""
    a = x[..., 0]
    b = x[..., 1]
    div = jnp.zeros(x.shape[:-1], dtype=x.dtype)
    div = div.at[:, :, :, 1:].add(a[:, :, :, :-1])
    div = div.at[:, :, :, :-1].add(-a[:, :, :, :-1])
    div = div.at[:, :, 1:, :].add(b[:, :, :-1, :])
    div = div.at[:, :, :-1, :].add(-b[:, :, :-1, :])
    return div


if __name__ == "__main__":
    key = jax.random.PRNGKey(0)
    x = jax.random.normal(key, (2, 4, 16, 16, 2), dtype=jnp.float32)

    out = jax.block_until_ready(div_forward(x))
    ref = div_reference(x)

    assert out.shape == (2, 4, 16, 16), out.shape
    assert out.dtype == x.dtype
    assert jnp.allclose(out, ref, atol=1e-5, rtol=1e-5), "mismatch vs reference"

    print("KERNEL_OK")
</pallas_src>

<mosaic_0001>
module attributes {stable_mosaic.version = 11 : i64} {
  func.func @_div_kernel(%arg0: i32, %arg1: memref<8x256xf32, #tpu.memory_space<vmem>>, %arg2: memref<8x256xf32, #tpu.memory_space<vmem>>, %arg3: memref<8x256xf32, #tpu.memory_space<vmem>>) attributes {dimension_semantics = [#tpu.dimension_semantics<parallel>], iteration_bounds = array<i64: 1>, scalar_prefetch = 0 : i64, scratch_operands = 0 : i64, tpu.core_type = #tpu.core_type<tc>, window_params = [{transform_indices = @transform_0, window_bounds = array<i64: 8, 256>}, {transform_indices = @transform_1, window_bounds = array<i64: 8, 256>}, {transform_indices = @transform_2, window_bounds = array<i64: 8, 256>}]} {
    %c0 = arith.constant 0 : index
    %c0_0 = arith.constant 0 : index
    %0 = vector.load %arg1[%c0, %c0_0] : memref<8x256xf32, #tpu.memory_space<vmem>>, vector<8x256xf32>
    %c0_1 = arith.constant 0 : index
    %c0_2 = arith.constant 0 : index
    %1 = vector.load %arg2[%c0_1, %c0_2] : memref<8x256xf32, #tpu.memory_space<vmem>>, vector<8x256xf32>
    %2 = tpu.iota {dimensions = array<i32: 1>} : vector<8x256xi32>
    %c15_i32 = arith.constant 15 : i32
    %3 = vector.broadcast %c15_i32 : i32 to vector<8x256xi32>
    %4 = arith.andi %2, %3 : vector<8x256xi32>
    %c15_i32_3 = arith.constant 15 : i32
    %5 = vector.broadcast %c15_i32_3 : i32 to vector<8x256xi32>
    %6 = arith.cmpi slt, %4, %5 : vector<8x256xi32>
    %cst = arith.constant 0.000000e+00 : f32
    %7 = vector.broadcast %cst : f32 to vector<8x256xf32>
    %8 = arith.select %6, %0, %7 : vector<8x256xi1>, vector<8x256xf32>
    %c240_i32 = arith.constant 240 : i32
    %9 = vector.broadcast %c240_i32 : i32 to vector<8x256xi32>
    %10 = arith.cmpi slt, %2, %9 : vector<8x256xi32>
    %cst_4 = arith.constant 0.000000e+00 : f32
    %11 = vector.broadcast %cst_4 : f32 to vector<8x256xf32>
    %12 = arith.select %10, %1, %11 : vector<8x256xi1>, vector<8x256xf32>
    %c1_i32 = arith.constant 1 : i32
    %13 = tpu.dynamic_rotate %8 by %c1_i32 dim 1 : vector<8x256xf32>, i32 -> vector<8x256xf32>
    %14 = arith.subf %13, %8 : vector<8x256xf32>
    %c16_i32 = arith.constant 16 : i32
    %15 = tpu.dynamic_rotate %12 by %c16_i32 dim 1 : vector<8x256xf32>, i32 -> vector<8x256xf32>
    %16 = arith.addf %14, %15 : vector<8x256xf32>
    %17 = arith.subf %16, %12 : vector<8x256xf32>
    %c0_5 = arith.constant 0 : index
    %c0_6 = arith.constant 0 : index
    %18 = vector.load %arg3[%c0_5, %c0_6] : memref<8x256xf32, #tpu.memory_space<vmem>>, vector<8x256xf32>
    tpu.vector_store %arg3[%c0_5, %c0_6], %17 {strides = array<i32>} : memref<8x256xf32, #tpu.memory_space<vmem>>, vector<8x256xf32>,
    return
  }
  func.func @transform_0(%arg0: i32) -> (i32, i32) {
    %c0_i32 = arith.constant 0 : i32
    %c0_i32_0 = arith.constant 0 : i32
    return %arg0, %c0_i32 : i32, i32
  }
  func.func @transform_1(%arg0: i32) -> (i32, i32) {
    %c0_i32 = arith.constant 0 : i32
    %c0_i32_0 = arith.constant 0 : i32
    return %arg0, %c0_i32 : i32, i32
  }
  func.func @transform_2(%arg0: i32) -> (i32, i32) {
    %c0_i32 = arith.constant 0 : i32
    %c0_i32_0 = arith.constant 0 : i32
    return %arg0, %c0_i32 : i32, i32
  }
}

</mosaic_0001>

<llo_original>
// kernel: squeeze.3
$region0: #{squeeze.3}
  %s0 = inlined_call_operand.vmem [shape: f32[2,4,16,16], index: 0, kind: input, shape index: {}]
  %s1 = inlined_call_operand.hbm [shape: f32[8,256], index: 1, kind: output, shape index: {}]
  $region1: #{squeeze.3} parent=0
    #allocation0 [shape = 'u8[8192]{0}', space=vmem, size = 0x2000, scoped, tag = 'operand span for operand 1']
    #allocation1 [shape = 's32[1]{0}', space=sflag, size = 0x4, scoped, tag = 'scoped memory for squeeze.3']
    %2 = vsyncpa [#allocation1], 0
    %v3 = vld [vmem:[%s0] ss:$8 sm:$0xf]
    %v4 = vld [vmem:[%s0] ss:$8 sm:$0xf0]
    %vm5 = vcmask 1047556
    %v6 = vsel %vm5, %v4, %v3
    %vm7 = vcmask 130048
    %8 = vst.msk [vmem:[#allocation0] ss:$8 sm:$0x3] %vm7, %v6
    %s9 = scalar_lea.vmem [#allocation0], 4294967281
    %10 = vst.msk [vmem:[%s9] ss:$8 sm:$0xc] %vm7, %v6
    %s11 = scalar_lea.vmem [#allocation0], 4294967266
    %12 = vst.msk [vmem:[%s11] ss:$8 sm:$0x30] %vm7, %v6
    %s13 = scalar_lea.vmem [#allocation0], 4294967251
    %14 = vst.msk [vmem:[%s13] ss:$8 sm:$0xc0] %vm7, %v6
    %s15 = scalar_lea.vmem %s0, 64
    %v16 = vld [vmem:[%s15] ss:$8 sm:$0xf]
    %s17 = scalar_lea.vmem %s0, 64
    %v18 = vld [vmem:[%s17] ss:$8 sm:$0xf0]
    %vm19 = vcmask 1047556
    %v20 = vsel %vm19, %v18, %v16
    %vm21 = vcmask 130048
    %s22 = scalar_lea.vmem [#allocation0], 4
    %23 = vst.msk [vmem:[%s22] ss:$8 sm:$0x3] %vm21, %v20
    %s24 = scalar_lea.vmem [#allocation0], 4294967285
    %25 = vst.msk [vmem:[%s24] ss:$8 sm:$0xc] %vm21, %v20
    %s26 = scalar_lea.vmem [#allocation0], 4294967270
    %27 = vst.msk [vmem:[%s26] ss:$8 sm:$0x30] %vm21, %v20
    %s28 = scalar_lea.vmem [#allocation0], 4294967255
    %29 = vst.msk [vmem:[%s28] ss:$8 sm:$0xc0] %vm21, %v20
    %s30 = scalar_lea.vmem %s0, 7
    %s31 = smov 3
    %v32 = vld [vmem:[%s30] ss:$16 sm:%s31]
    %s33 = scalar_lea.vmem %s0, 7
    %s34 = smov 12
    %v35 = vld [vmem:[%s33] ss:$16 sm:%s34]
    %vm36 = vcmask 1043458
    %v37 = vsel %vm36, %v35, %v32
    %s38 = scalar_lea.vmem %s0, 7
    %s39 = smov 48
    %v40 = vld [vmem:[%s38] ss:$16 sm:%s39]
    %vm41 = vcmask 1045508
    %v42 = vsel %vm41, %v40, %v37
    %s43 = scalar_lea.vmem %s0, 7
    %s44 = smov 192
    %v45 = vld [vmem:[%s43] ss:$16 sm:%s44]
    %vm46 = vcmask 1047558
    %v47 = vsel %vm46, %v45, %v42
    %48 = vrot.lane.b32.xlu0 %v47, 112
    %v49 = vpop.permute.xlu0 %48
    %vm50 = vcmask 1048448
    %51 = vst.msk [vmem:[#allocation0] sm:$0xff] %vm50, %v49
    %s52 = scalar_lea.vmem %s0, 15
    %s53 = smov 3
    %v54 = vld [vmem:[%s52] ss:$16 sm:%s53]
    %s55 = scalar_lea.vmem %s0, 15
    %s56 = smov 12
    %v57 = vld [vmem:[%s55] ss:$16 sm:%s56]
    %vm58 = vcmask 1043458
    %v59 = vsel %vm58, %v57, %v54
    %s60 = scalar_lea.vmem %s0, 15
    %s61 = smov 48
    %v62 = vld [vmem:[%s60] ss:$16 sm:%s61]
    %vm63 = vcmask 1045508
    %v64 = vsel %vm63, %v62, %v59
    %s65 = scalar_lea.vmem %s0, 15
    %s66 = smov 192
    %v67 = vld [vmem:[%s65] ss:$16 sm:%s66]
    %vm68 = vcmask 1047558
    %v69 = vsel %vm68, %v67, %v64
    %70 = vrot.lane.b32.xlu0 %v69, 112
    %v71 = vpop.permute.xlu0 %70
    %vm72 = vcmask 1048448
    %s73 = scalar_lea.vmem [#allocation0], 8
    %74 = vst.msk [vmem:[%s73] sm:$0xff] %vm72, %v71
    %s75 = scalar_lea.vmem %s0, 6
    %s76 = smov 3
    %v77 = vld [vmem:[%s75] ss:$16 sm:%s76]
    %s78 = scalar_lea.vmem %s0, 6
    %s79 = smov 12
    %v80 = vld [vmem:[%s78] ss:$16 sm:%s79]
    %vm81 = vcmask 1043458
    %v82 = vsel %vm81, %v80, %v77
    %s83 = scalar_lea.vmem %s0, 6
    %s84 = smov 48
    %v85 = vld [vmem:[%s83] ss:$16 sm:%s84]
    %vm86 = vcmask 1045508
    %v87 = vsel %vm86, %v85, %v82
    %s88 = scalar_lea.vmem %s0, 6
    %s89 = smov 192
    %v90 = vld [vmem:[%s88] ss:$16 sm:%s89]
    %vm91 = vcmask 1047558
    %v92 = vsel %vm91, %v90, %v87
    %93 = vrot.lane.b32.xlu0 %v92, 96
    %v94 = vpop.permute.xlu0 %93
    %vm95 = vcmask 917248
    %96 = vst.msk [vmem:[#allocation0] sm:$0xff] %vm95, %v94
    %s97 = scalar_lea.vmem %s0, 14
    %s98 = smov 3
    %v99 = vld [vmem:[%s97] ss:$16 sm:%s98]
    %s100 = scalar_lea.vmem %s0, 14
    %s101 = smov 12
    %v102 = vld [vmem:[%s100] ss:$16 sm:%s101]
    %vm103 = vcmask 1043458
    %v104 = vsel %vm103, %v102, %v99
    %s105 = scalar_lea.vmem %s0, 14
    %s106 = smov 48
    %v107 = vld [vmem:[%s105] ss:$16 sm:%s106]
    %vm108 = vcmask 1045508
    %v109 = vsel %vm108, %v107, %v104
    %s110 = scalar_lea.vmem %s0, 14
    %s111 = smov 192
    %v112 = vld [vmem:[%s110] ss:$16 sm:%s111]
    %vm113 = vcmask 1047558
    %v114 = vsel %vm113, %v112, %v109
    %115 = vrot.lane.b32.xlu0 %v114, 96
    %v116 = vpop.permute.xlu0 %115
    %vm117 = vcmask 917248
    %s118 = scalar_lea.vmem [#allocation0], 8
    %119 = vst.msk [vmem:[%s118] sm:$0xff] %vm117, %v116
    %s120 = scalar_lea.vmem %s0, 5
    %s121 = smov 3
    %v122 = vld [vmem:[%s120] ss:$16 sm:%s121]
    %s123 = scalar_lea.vmem %s0, 5
    %s124 = smov 12
    %v125 = vld [vmem:[%s123] ss:$16 sm:%s124]
    %vm126 = vcmask 1043458
    %v127 = vsel %vm126, %v125, %v122
    %s128 = scalar_lea.vmem %s0, 5
    %s129 = smov 48
    %v130 = vld [vmem:[%s128] ss:$16 sm:%s129]
    %vm131 = vcmask 1045508
    %v132 = vsel %vm131, %v130, %v127
    %s133 = scalar_lea.vmem %s0, 5
    %s134 = smov 192
    %v135 = vld [vmem:[%s133] ss:$16 sm:%s134]
    %vm136 = vcmask 1047558
    %v137 = vsel %vm136, %v135, %v132
    %138 = vrot.lane.b32.xlu0 %v137, 80
    %v139 = vpop.permute.xlu0 %138
    %vm140 = vcmask 786048
    %141 = vst.msk [vmem:[#allocation0] sm:$0xff] %vm140, %v139
    %s142 = scalar_lea.vmem %s0, 13
    %s143 = smov 3
    %v144 = vld [vmem:[%s142] ss:$16 sm:%s143]
    %s145 = scalar_lea.vmem %s0, 13
    %s146 = smov 12
    %v147 = vld [vmem:[%s145] ss:$16 sm:%s146]
    %vm148 = vcmask 1043458
    %v149 = vsel %vm148, %v147, %v144
    %s150 = scalar_lea.vmem %s0, 13
    %s151 = smov 48
    %v152 = vld [vmem:[%s150] ss:$16 sm:%s151]
    %vm153 = vcmask 1045508
    %v154 = vsel %vm153, %v152, %v149
    %s155 = scalar_lea.vmem %s0, 13
    %s156 = smov 192
    %v157 = vld [vmem:[%s155] ss:$16 sm:%s156]
    %vm158 = vcmask 1047558
    %v159 = vsel %vm158, %v157, %v154
    %160 = vrot.lane.b32.xlu0 %v159, 80
    %v161 = vpop.permute.xlu0 %160
    %vm162 = vcmask 786048
    %s163 = scalar_lea.vmem [#allocation0], 8
    %164 = vst.msk [vmem:[%s163] sm:$0xff] %vm162, %v161
    %s165 = scalar_lea.vmem %s0, 4
    %s166 = smov 3
    %v167 = vld [vmem:[%s165] ss:$16 sm:%s166]
    %s168 = scalar_lea.vmem %s0, 4
    %s169 = smov 12
    %v170 = vld [vmem:[%s168] ss:$16 sm:%s169]
    %vm171 = vcmask 1043458
    %v172 = vsel %vm171, %v170, %v167
    %s173 = scalar_lea.vmem %s0, 4
    %s174 = smov 48
    %v175 = vld [vmem:[%s173] ss:$16 sm:%s174]
    %vm176 = vcmask 1045508
    %v177 = vsel %vm176, %v175, %v172
    %s178 = scalar_lea.vmem %s0, 4
    %s179 = smov 192
    %v180 = vld [vmem:[%s178] ss:$16 sm:%s179]
    %vm181 = vcmask 1047558
    %v182 = vsel %vm181, %v180, %v177
    %183 = vrot.lane.b32.xlu0 %v182, 64
    %v184 = vpop.permute.xlu0 %183
    %vm185 = vcmask 654848
    %186 = vst.msk [vmem:[#allocation0] sm:$0xff] %vm185, %v184
    %s187 = scalar_lea.vmem %s0, 12
    %s188 = smov 3
    %v189 = vld [vmem:[%s187] ss:$16 sm:%s188]
    %s190 = scalar_lea.vmem %s0, 12
    %s191 = smov 12
    %v192 = vld [vmem:[%s190] ss:$16 sm:%s191]
    %vm193 = vcmask 1043458
    %v194 = vsel %vm193, %v192, %v189
    %s195 = scalar_lea.vmem %s0, 12
    %s196 = smov 48
    %v197 = vld [vmem:[%s195] ss:$16 sm:%s196]
    %vm198 = vcmask 1045508
    %v199 = vsel %vm198, %v197, %v194
    %s200 = scalar_lea.vmem %s0, 12
    %s201 = smov 192
    %v202 = vld [vmem:[%s200] ss:$16 sm:%s201]
    %vm203 = vcmask 1047558
    %v204 = vsel %vm203, %v202, %v199
    %205 = vrot.lane.b32.xlu0 %v204, 64
    %v206 = vpop.permute.xlu0 %205
    %vm207 = vcmask 654848
    %s208 = scalar_lea.vmem [#allocation0], 8
    %209 = vst.msk [vmem:[%s208] sm:$0xff] %vm207, %v206
    %s210 = scalar_lea.vmem %s0, 3
    %s211 = smov 3
    %v212 = vld [vmem:[%s210] ss:$16 sm:%s211]
    %s213 = scalar_lea.vmem %s0, 3
    %s214 = smov 12
    %v215 = vld [vmem:[%s213] ss:$16 sm:%s214]
    %vm216 = vcmask 1043458
    %v217 = vsel %vm216, %v215, %v212
    %s218 = scalar_lea.vmem %s0, 3
    %s219 = smov 48
    %v220 = vld [vmem:[%s218] ss:$16 sm:%s219]
    %vm221 = vcmask 1045508
    %v222 = vsel %vm221, %v220, %v217
    %s223 = scalar_lea.vmem %s0, 3
    %s224 = smov 192
    %v225 = vld [vmem:[%s223] ss:$16 sm:%s224]
    %vm226 = vcmask 1047558
    %v227 = vsel %vm226, %v225, %v222
    %228 = vrot.lane.b32.xlu0 %v227, 48
    %v229 = vpop.permute.xlu0 %228
    %vm230 = vcmask 523648
    %231 = vst.msk [vmem:[#allocation0] sm:$0xff] %vm230, %v229
    %s232 = scalar_lea.vmem %s0, 11
    %s233 = smov 3
    %v234 = vld [vmem:[%s232] ss:$16 sm:%s233]
    %s235 = scalar_lea.vmem %s0, 11
    %s236 = smov 12
    %v237 = vld [vmem:[%s235] ss:$16 sm:%s236]
    %vm238 = vcmask 1043458
    %v239 = vsel %vm238, %v237, %v234
    %s240 = scalar_lea.vmem %s0, 11
    %s241 = smov 48
    %v242 = vld [vmem:[%s240] ss:$16 sm:%s241]
    %vm243 = vcmask 1045508
    %v244 = vsel %vm243, %v242, %v239
    %s245 = scalar_lea.vmem %s0, 11
    %s246 = smov 192
    %v247 = vld [vmem:[%s245] ss:$16 sm:%s246]
    %vm248 = vcmask 1047558
    %v249 = vsel %vm248, %v247, %v244
    %250 = vrot.lane.b32.xlu0 %v249, 48
    %v251 = vpop.permute.xlu0 %250
    %vm252 = vcmask 523648
    %s253 = scalar_lea.vmem [#allocation0], 8
    %254 = vst.msk [vmem:[%s253] sm:$0xff] %vm252, %v251
    %s255 = scalar_lea.vmem %s0, 2
    %s256 = smov 3
    %v257 = vld [vmem:[%s255] ss:$16 sm:%s256]
    %s258 = scalar_lea.vmem %s0, 2
    %s259 = smov 12
    %v260 = vld [vmem:[%s258] ss:$16 sm:%s259]
    %vm261 = vcmask 1043458
    %v262 = vsel %vm261, %v260, %v257
    %s263 = scalar_lea.vmem %s0, 2
    %s264 = smov 48
    %v265 = vld [vmem:[%s263] ss:$16 sm:%s264]
    %vm266 = vcmask 1045508
    %v267 = vsel %vm266, %v265, %v262
    %s268 = scalar_lea.vmem %s0, 2
    %s269 = smov 192
    %v270 = vld [vmem:[%s268] ss:$16 sm:%s269]
    %vm271 = vcmask 1047558
    %v272 = vsel %vm271, %v270, %v267
    %273 = vrot.lane.b32.xlu0 %v272, 32
    %v274 = vpop.permute.xlu0 %273
    %vm275 = vcmask 392448
    %276 = vst.msk [vmem:[#allocation0] sm:$0xff] %vm275, %v274
    %s277 = scalar_lea.vmem %s0, 10
    %s278 = smov 3
    %v279 = vld [vmem:[%s277] ss:$16 sm:%s278]
    %s280 = scalar_lea.vmem %s0, 10
    %s281 = smov 12
    %v282 = vld [vmem:[%s280] ss:$16 sm:%s281]
    %vm283 = vcmask 1043458
    %v284 = vsel %vm283, %v282, %v279
    %s285 = scalar_lea.vmem %s0, 10
    %s286 = smov 48
    %v287 = vld [vmem:[%s285] ss:$16 sm:%s286]
    %vm288 = vcmask 1045508
    %v289 = vsel %vm288, %v287, %v284
    %s290 = scalar_lea.vmem %s0, 10
    %s291 = smov 192
    %v292 = vld [vmem:[%s290] ss:$16 sm:%s291]
    %vm293 = vcmask 1047558
    %v294 = vsel %vm293, %v292, %v289
    %295 = vrot.lane.b32.xlu0 %v294, 32
    %v296 = vpop.permute.xlu0 %295
    %vm297 = vcmask 392448
    %s298 = scalar_lea.vmem [#allocation0], 8
    %299 = vst.msk [vmem:[%s298] sm:$0xff] %vm297, %v296
    %s300 = scalar_lea.vmem %s0, 1
    %s301 = smov 3
    %v302 = vld [vmem:[%s300] ss:$16 sm:%s301]
    %s303 = scalar_lea.vmem %s0, 1
    %s304 = smov 12
    %v305 = vld [vmem:[%s303] ss:$16 sm:%s304]
    %vm306 = vcmask 1043458
    %v307 = vsel %vm306, %v305, %v302
    %s308 = scalar_lea.vmem %s0, 1
    %s309 = smov 48
    %v310 = vld [vmem:[%s308] ss:$16 sm:%s309]
    %vm311 = vcmask 1045508
    %v312 = vsel %vm311, %v310, %v307
    %s313 = scalar_lea.vmem %s0, 1
    %s314 = smov 192
    %v315 = vld [vmem:[%s313] ss:$16 sm:%s314]
    %vm316 = vcmask 1047558
    %v317 = vsel %vm316, %v315, %v312
    %318 = vrot.lane.b32.xlu0 %v317, 16
    %v319 = vpop.permute.xlu0 %318
    %vm320 = vcmask 261248
    %321 = vst.msk [vmem:[#allocation0] sm:$0xff] %vm320, %v319
    %s322 = scalar_lea.vmem %s0, 9
    %s323 = smov 3
    %v324 = vld [vmem:[%s322] ss:$16 sm:%s323]
    %s325 = scalar_lea.vmem %s0, 9
    %s326 = smov 12
    %v327 = vld [vmem:[%s325] ss:$16 sm:%s326]
    %vm328 = vcmask 1043458
    %v329 = vsel %vm328, %v327, %v324
    %s330 = scalar_lea.vmem %s0, 9
    %s331 = smov 48
    %v332 = vld [vmem:[%s330] ss:$16 sm:%s331]
    %vm333 = vcmask 1045508
    %v334 = vsel %vm333, %v332, %v329
    %s335 = scalar_lea.vmem %s0, 9
    %s336 = smov 192
    %v337 = vld [vmem:[%s335] ss:$16 sm:%s336]
    %vm338 = vcmask 1047558
    %v339 = vsel %vm338, %v337, %v334
    %340 = vrot.lane.b32.xlu0 %v339, 16
    %v341 = vpop.permute.xlu0 %340
    %vm342 = vcmask 261248
    %s343 = scalar_lea.vmem [#allocation0], 8
    %344 = vst.msk [vmem:[%s343] sm:$0xff] %vm342, %v341
    %s346 = ssub.s32 256, 256
    %347 = vsyncadd [#allocation1], %s346
    %s349 = sshll.u32 [#allocation0], 4
    %s350 = int_to_ptr.vmem [resolvable:$true] %s349
    %352 = dma.vmem_to_hbm [thread:$0]  %s350, 256, %s1, [#allocation1]
    %353 = dma.done [#allocation1], 256
    %354 = vsyncpa [#allocation1], 1

// kernel: div_forward.1
$region0: #{div_forward.1}
  #allocation0 [shape = 'u32[]', space=smem, size = 0x4, offset = 0x4, fixed_abs, tag = 'smem constant byte address 0x4 - core index']
  #allocation1 [shape = 'u32[144,128]{1,0:T(1,128)}', space=vmem, size = 0x12000, scoped, tag = 'internal scratch']
  %s0 = inlined_call_operand.hbm [shape: f32[8,256], index: 0, kind: input, shape index: {}]
  %s1 = inlined_call_operand.hbm [shape: f32[8,256], index: 1, kind: input, shape index: {}]
  %s2 = inlined_call_operand.hbm [shape: f32[8,256], index: 2, kind: output, shape index: {}]
  %s3 = sld [smem:[#allocation0]]
  $region26: #{div_forward.1} parent=0
    _
  %s5 = ssub.s32 1, %s3
  %s6 = scalar_select 0, %s5, %s3
  $region1: #{div_forward.1} parent=0
    #allocation2 [shape = 'u8[8192]{0}', space=vmem, size = 0x2000, scoped, tag = 'input window, operand 0, single buffered']
    #allocation3 [shape = 's32[1]{0}', space=sflag, size = 0x4, scoped, tag = 'scoped memory for div_forward.1']
    #allocation4 [shape = 's32[1]{0}', space=sflag, size = 0x4, scoped, tag = 'scoped memory for div_forward.1']
    #allocation5 [shape = 'u8[8192]{0}', space=vmem, size = 0x2000, scoped, tag = 'input window, operand 1, single buffered']
    #allocation6 [shape = 's32[1]{0}', space=sflag, size = 0x4, scoped, tag = 'scoped memory for div_forward.1']
    #allocation7 [shape = 'u8[8192]{0}', space=vmem, size = 0x2000, scoped, tag = 'output window, operand 0, single buffered']
    %7 = vsyncpa [#allocation3], 0
    %8 = vsyncpa [#allocation6], 0
    %9 = vsyncpa [#allocation4], 0
    // Predicated region
    $region2: #{div_forward.1} parent=1 // pred_check
      _
    $region3: #{div_forward.1} parent=1 // pred_check_branch
      %11 = sbr.rel (0) target = $region5
    $region4: #{div_forward.1} parent=1 // pred_region
      %s13 = ssub.s32 256, 256
      %14 = vsyncadd [#allocation3], %s13
      %s16 = sshll.u32 [#allocation2], 4
      %s17 = int_to_ptr.vmem [resolvable:$true] %s16
      %19 = dma.hbm_to_vmem [thread:$0]  %s0, 256, %s17, [#allocation3]
    $region5: #{div_forward.1} parent=1 // pred_fallthru
      _
    // Predicated region
    $region6: #{div_forward.1} parent=1 // pred_check
      _
    $region7: #{div_forward.1} parent=1 // pred_check_branch
      %21 = sbr.rel (0) target = $region9
    $region8: #{div_forward.1} parent=1 // pred_region
      %s23 = ssub.s32 256, 256
      %24 = vsyncadd [#allocation6], %s23
      %s26 = sshll.u32 [#allocation5], 4
      %s27 = int_to_ptr.vmem [resolvable:$true] %s26
      %29 = dma.hbm_to_vmem [thread:$0]  %s1, 256, %s27, [#allocation6]
    $region9: #{div_forward.1} parent=1 // pred_fallthru
      _
    // Predicated region
    $region10: #{div_forward.1} parent=1 // pred_check
      _
    $region11: #{div_forward.1} parent=1 // pred_check_branch
      %31 = sbr.rel (0) target = $region13
    $region12: #{div_forward.1} parent=1 // pred_region
      %32 = dma.done [#allocation3], 256
    $region13: #{div_forward.1} parent=1 // pred_fallthru
      _
    // Predicated region
    $region14: #{div_forward.1} parent=1 // pred_check
      _
    $region15: #{div_forward.1} parent=1 // pred_check_branch
      %34 = sbr.rel (0) target = $region17
    $region16: #{div_forward.1} parent=1 // pred_region
      %35 = dma.done [#allocation6], 256
    $region17: #{div_forward.1} parent=1 // pred_fallthru
      _
    %v36 = vld [vmem:[#allocation2] sm:$0xff]
    %v37 = vld [vmem:[#allocation2 + $0x8] sm:$0xff]
    %v38 = vld [vmem:[#allocation5] sm:$0xff]
    %v39 = vld [vmem:[#allocation5 + $0x8] sm:$0xff]
    %v40 = vlaneseq
    %v41 = vand.u32 %v40, 127
    %v42 = vadd.s32 %v41, 128
    %v43 = vand.u32 %v41, 15
    %v44 = vand.u32 %v42, 15
    %vm45 = vcmp.lt.s32.totalorder %v43, 15
    %vm46 = vcmp.lt.s32.totalorder %v44, 15
    %v47 = vsel %vm45, %v36, 0.0
    %v48 = vsel %vm46, %v37, 0.0
    %vm49 = vcmp.lt.s32.totalorder %v41, 240
    %vm50 = vcmp.lt.s32.totalorder %v42, 240
    %v51 = vsel %vm49, %v38, 0.0
    %v52 = vsel %vm50, %v39, 0.0
    %53 = vrot.lane.b32.xlu0 %v47, 1
    %v54 = vpop.permute.xlu0 %53
    %55 = vrot.lane.b32.xlu0 %v48, 1
    %v56 = vpop.permute.xlu0 %55
    %vm57 = vcmp.lt.s32.totalorder %v41, 1
    %v58 = vsel %vm57, %v54, %v56
    %v59 = vsel %vm57, %v56, %v54
    %v60 = vsub.f32 %v59, %v47
    %v61 = vsub.f32 %v58, %v48
    %62 = vrot.lane.b32.xlu0 %v51, 16
    %v63 = vpop.permute.xlu0 %62
    %64 = vrot.lane.b32.xlu0 %v52, 16
    %v65 = vpop.permute.xlu0 %64
    %vm66 = vcmp.lt.s32.totalorder %v41, 16
    %v67 = vsel %vm66, %v63, %v65
    %v68 = vsel %vm66, %v65, %v63
    %v69 = vadd.f32 %v60, %v68
    %v70 = vadd.f32 %v61, %v67
    %v71 = vsub.f32 %v69, %v51
    %v72 = vsub.f32 %v70, %v52
    %73 = vst [vmem:[#allocation7] sm:$0xff] %v71
    %74 = vst [vmem:[#allocation7 + $0x8] sm:$0xff] %v72
    // Predicated region
    $region18: #{div_forward.1} parent=1 // pred_check
      _
    $region19: #{div_forward.1} parent=1 // pred_check_branch
      %76 = sbr.rel (0) target = $region21
    $region20: #{div_forward.1} parent=1 // pred_region
      %s78 = ssub.s32 256, 256
      %79 = vsyncadd [#allocation4], %s78
      %s81 = sshll.u32 [#allocation7], 4
      %s82 = int_to_ptr.vmem [resolvable:$true] %s81
      %84 = dma.vmem_to_hbm [thread:$0]  %s82, 256, %s2, [#allocation4]
    $region21: #{div_forward.1} parent=1 // pred_fallthru
      _
    // Predicated region
    $region22: #{div_forward.1} parent=1 // pred_check
      _
    $region23: #{div_forward.1} parent=1 // pred_check_branch
      %86 = sbr.rel (0) target = $region25
    $region24: #{div_forward.1} parent=1 // pred_region
      %87 = dma.done [#allocation4], 256
    $region25: #{div_forward.1} parent=1 // pred_fallthru
      _
    %88 = vsyncpa [#allocation3], 1
    %89 = vsyncpa [#allocation6], 1
    %90 = vsyncpa [#allocation4], 1

</llo_original>
